<compile_context>
chip_gen: v7x
topology: tpu7x:2x2x1
jax: 0.10.0
libtpu: 0.0.40
codegen_flags: <defaults>
</compile_context>

<pallas_src>
import functools

import jax
import jax.numpy as jnp
from jax.experimental import pallas as pl
from jax.experimental.pallas import tpu as pltpu


# --------------------------------------------------------------------------- #
# Helpers
# --------------------------------------------------------------------------- #
def _cdiv(a: int, b: int) -> int:
    return -(-a // b)


def _round_up(v: int, m: int) -> int:
    return _cdiv(v, m) * m


def _vmem_limit_bytes() -> int:
    """Generation-aware scoped-VMEM limit (3/4 of physical, capped at 96 MiB)."""
    cap = 64 * 1024 * 1024  # conservative default (v7x per-TC physical VMEM)
    try:
        info = pltpu.get_tpu_info()
        cap = int(getattr(info, "vmem_capacity_bytes", cap))
    except Exception:
        pass
    return min(96 * 1024 * 1024, (cap * 3) // 4)


# --------------------------------------------------------------------------- #
# Fused single-call kernel (channel slab resident in VMEM)
# --------------------------------------------------------------------------- #
def _bn_fused_kernel(x_ref, w_ref, b_ref, o_ref, *, eps: float, inv_n: float,
                     bf16_norm: bool):
    # Pass 1: per-channel mean (f32 accumulation).  Re-read x_ref per pass so
    # no full-slab f32 value stays live across traversals (avoids VMEM spill).
    mean = jnp.sum(x_ref[...].astype(jnp.float32), axis=(0, 2),
                   keepdims=True) * inv_n                            # (1, Ct, 1)

    # Pass 2: centered sum of squares (two-pass population variance; robust
    # against cancellation when |mean| >> std).
    var = jnp.sum(jnp.square(x_ref[...].astype(jnp.float32) - mean),
                  axis=(0, 2), keepdims=True) * inv_n                # (1, Ct, 1)
    inv_std = jax.lax.rsqrt(var + eps)                               # EUP slot

    # Fold per-channel affine into scale/shift: out = x * scale + shift.
    w = w_ref[...].astype(jnp.float32)                               # (1, Ct, 1)
    b = b_ref[...].astype(jnp.float32)
    scale = w * inv_std
    shift = b - mean * scale

    # Pass 3: normalize (fresh read of the resident slab).
    if bf16_norm:
        o_ref[...] = x_ref[...] * scale.astype(o_ref.dtype) + shift.astype(o_ref.dtype)
    else:
        o_ref[...] = (x_ref[...].astype(jnp.float32) * scale + shift).astype(o_ref.dtype)


def _batch_norm_fused(x3, weight, bias, *, eps, inv_n, slab_budget, vmem_limit,
                      max_ct, bf16_norm):
    B, C, HW = x3.shape
    itemsize = jnp.dtype(x3.dtype).itemsize

    # Target >=2 (up to 4) channel blocks when C allows: shards across v7x's
    # two TensorCores and gives single-TC chips DMA/compute overlap.
    desired_blocks = max(1, min(4, C // 8))
    ct = min(C, max_ct, _round_up(_cdiv(C, desired_blocks), 8))
    if ct < C:
        ct = max(8, (ct // 8) * 8)  # (8,128) rule: partial channel blocks need ct % 8 == 0
    num_blocks = _cdiv(C, ct)
    c_pad = num_blocks * ct

    # Tail channel block (if any) computes garbage stats from padded rows, but
    # those rows' outputs are masked/discarded, so results are unaffected.
    w2 = jnp.pad(weight, (0, c_pad - C)).reshape(1, c_pad, 1)
    b2 = jnp.pad(bias, (0, c_pad - C)).reshape(1, c_pad, 1)

    kernel = functools.partial(_bn_fused_kernel, eps=float(eps), inv_n=inv_n,
                               bf16_norm=bf16_norm)
    cost = pl.CostEstimate(
        flops=int(8 * B * C * HW),
        transcendentals=int(C),
        bytes_accessed=int(2 * B * C * HW * itemsize),
    )

    out = pl.pallas_call(
        kernel,
        out_shape=jax.ShapeDtypeStruct((B, C, HW), x3.dtype),
        grid_spec=pltpu.PrefetchScalarGridSpec(
            num_scalar_prefetch=0,
            grid=(num_blocks,),
            in_specs=[
                # Lane-dense slab: full H*W on lanes, channel tile on sublanes.
                pl.BlockSpec((B, ct, HW), lambda ci: (0, ci, 0)),
                # Per-step per-channel affine params (tiny DMA, fully hidden).
                pl.BlockSpec((1, ct, 1), lambda ci: (0, ci, 0)),
                pl.BlockSpec((1, ct, 1), lambda ci: (0, ci, 0)),
            ],
            out_specs=pl.BlockSpec((B, ct, HW), lambda ci: (0, ci, 0)),
        ),
        compiler_params=pltpu.CompilerParams(
            dimension_semantics=("parallel",),
            vmem_limit_bytes=vmem_limit,
        ),
        cost_estimate=cost,
    )(x3, w2, b2)
    return out


# --------------------------------------------------------------------------- #
# Streaming fallback: accumulate stats over a (C_blocks, B, HW_blocks) grid,
# then a second tiled pass normalizes with host-computed scale/shift.
# Used when even the minimum channel slab (B * HW * min(C,8)) exceeds budget.
# --------------------------------------------------------------------------- #
def _bn_stats_kernel(x_ref, sum_ref, sq_ref, *, hw: int, hwt: int, need_mask: bool):
    bi = pl.program_id(1)
    hi = pl.program_id(2)

    @pl.when((bi == 0) & (hi == 0))
    def _init():
        sum_ref[...] = jnp.zeros_like(sum_ref)
        sq_ref[...] = jnp.zeros_like(sq_ref)

    xf = x_ref[...].astype(jnp.float32)                  # (1, Ct, hwt) budget-sized block
    if need_mask:
        col = jax.lax.broadcasted_iota(jnp.int32, xf.shape, 2)
        xf = jnp.where(col + hi * hwt < hw, xf, 0.0)     # zero out HW tail padding
    sum_ref[...] += jnp.sum(xf, axis=(0, 2), keepdims=True)
    sq_ref[...] += jnp.sum(xf * xf, axis=(0, 2), keepdims=True)


def _bn_normalize_kernel(x_ref, scale_ref, shift_ref, o_ref, *, bf16_norm: bool):
    if bf16_norm:
        o_ref[...] = (x_ref[...] * scale_ref[...].astype(o_ref.dtype)
                      + shift_ref[...].astype(o_ref.dtype))
    else:
        o_ref[...] = (x_ref[...].astype(jnp.float32) * scale_ref[...]
                      + shift_ref[...]).astype(o_ref.dtype)


def _batch_norm_two_pass(x3, weight, bias, *, eps, inv_n, slab_budget, vmem_limit,
                         bf16_norm):
    B, C, HW = x3.shape
    itemsize = jnp.dtype(x3.dtype).itemsize

    # Tile sizes: (1, ct, hwt) blocks sized to the slab budget.
    min_ct = C if C <= 8 else 8
    if HW <= 128 or HW * min_ct * itemsize <= slab_budget:
        hwt = HW
        grow = int(slab_budget // max(HW * itemsize, 1))
        if grow >= C or C <= 8:
            ct = C
        else:
            ct = max(8, (grow // 8) * 8)
    else:
        ct = min_ct
        hwt = int(slab_budget // max(ct * itemsize, 1))
        hwt = max(128, (hwt // 128) * 128)
        if hwt >= HW:
            hwt = HW

    num_c_blocks = _cdiv(C, ct)
    c_pad = num_c_blocks * ct
    nhw = _cdiv(HW, hwt)
    need_mask = (HW % hwt) != 0

    # Pass 1: per-channel sum / sum-of-squares accumulated in f32.
    # NOTE: this streaming pass uses E[x^2] - mean^2 (a centered two-pass
    # variance would need a third full HBM traversal); accumulation is f32.
    stats_kernel = functools.partial(_bn_stats_kernel, hw=HW, hwt=hwt,
                                     need_mask=need_mask)
    sums, sqs = pl.pallas_call(
        stats_kernel,
        out_shape=(jax.ShapeDtypeStruct((1, c_pad, 1), jnp.float32),
                   jax.ShapeDtypeStruct((1, c_pad, 1), jnp.float32)),
        grid_spec=pltpu.PrefetchScalarGridSpec(
            num_scalar_prefetch=0,
            grid=(num_c_blocks, B, nhw),
            in_specs=[pl.BlockSpec((1, ct, hwt), lambda ci, bi, hi: (bi, ci, hi))],
            out_specs=(pl.BlockSpec((1, ct, 1), lambda ci, bi, hi: (0, ci, 0)),
                       pl.BlockSpec((1, ct, 1), lambda ci, bi, hi: (0, ci, 0))),
        ),
        compiler_params=pltpu.CompilerParams(
            dimension_semantics=("parallel", "arbitrary", "arbitrary"),
            vmem_limit_bytes=vmem_limit,
        ),
    )(x3)

    # Tiny per-channel math on the host side of the kernel (C elements).
    wf = jnp.pad(weight.astype(jnp.float32), (0, c_pad - C)).reshape(1, c_pad, 1)
    bf = jnp.pad(bias.astype(jnp.float32), (0, c_pad - C)).reshape(1, c_pad, 1)
    mean = sums * inv_n
    var = jnp.maximum(sqs * inv_n - mean * mean, 0.0)    # population variance
    inv_std = jax.lax.rsqrt(var + eps)
    scale = wf * inv_std
    shift = bf - mean * scale

    # Pass 2: tiled normalize with folded affine.
    norm_kernel = functools.partial(_bn_normalize_kernel, bf16_norm=bf16_norm)
    out = pl.pallas_call(
        norm_kernel,
        out_shape=jax.ShapeDtypeStruct((B, C, HW), x3.dtype),
        grid_spec=pltpu.PrefetchScalarGridSpec(
            num_scalar_prefetch=0,
            grid=(num_c_blocks, B, nhw),
            in_specs=[
                pl.BlockSpec((1, ct, hwt), lambda ci, bi, hi: (bi, ci, hi)),
                pl.BlockSpec((1, ct, 1), lambda ci, bi, hi: (0, ci, 0)),
                pl.BlockSpec((1, ct, 1), lambda ci, bi, hi: (0, ci, 0)),
            ],
            out_specs=pl.BlockSpec((1, ct, hwt), lambda ci, bi, hi: (bi, ci, hi)),
        ),
        compiler_params=pltpu.CompilerParams(
            dimension_semantics=("parallel", "parallel", "parallel"),
            vmem_limit_bytes=vmem_limit,
        ),
    )(x3, scale, shift)
    return out


# --------------------------------------------------------------------------- #
# Public wrapper
# --------------------------------------------------------------------------- #
def batch_norm(x, weight=None, bias=None, *, eps: float = 1e-5,
               max_slab_bytes=None):
    """Forward pass of the module: per-channel stats over (B, H, W) + affine.

    x: [B, C, H, W]; weight/bias: [C] (None -> non-affine, i.e. ones/zeros).
    max_slab_bytes: optional override of the per-slab VMEM budget (testing).
    """
    B, C, H, W = x.shape
    HW = H * W

    if weight is None:
        weight = jnp.ones((C,), dtype=x.dtype)
    if bias is None:
        bias = jnp.zeros((C,), dtype=x.dtype)

    itemsize = jnp.dtype(x.dtype).itemsize
    vmem_limit = _vmem_limit_bytes()
    slab_budget = int(max_slab_bytes) if max_slab_bytes is not None else vmem_limit // 6
    inv_n = 1.0 / float(B * HW)
    bf16_norm = (x.dtype == jnp.bfloat16)

    x3 = x.reshape(B, C, HW)
    bytes_per_channel = B * HW * itemsize
    min_ct = C if C <= 8 else 8
    max_ct = int(slab_budget // max(bytes_per_channel, 1))

    if max_ct >= min_ct:
        out = _batch_norm_fused(x3, weight, bias, eps=eps, inv_n=inv_n,
                                slab_budget=slab_budget, vmem_limit=vmem_limit,
                                max_ct=max_ct, bf16_norm=bf16_norm)
    else:
        out = _batch_norm_two_pass(x3, weight, bias, eps=eps, inv_n=inv_n,
                                   slab_budget=slab_budget, vmem_limit=vmem_limit,
                                   bf16_norm=bf16_norm)
    return out.reshape(B, C, H, W)


# --------------------------------------------------------------------------- #
# Reference + tests
# --------------------------------------------------------------------------- #
def _batch_norm_ref(x, weight, bias, *, eps: float = 1e-5):
    xf = x.astype(jnp.float32)
    mean = jnp.mean(xf, axis=(0, 2, 3), keepdims=True)
    var = jnp.mean((xf - mean) ** 2, axis=(0, 2, 3), keepdims=True)
    norm = (xf - mean) / jnp.sqrt(var + eps)
    out = (weight.astype(jnp.float32)[None, :, None, None] * norm
           + bias.astype(jnp.float32)[None, :, None, None])
    return out.astype(x.dtype)


if __name__ == "__main__":
    key = jax.random.PRNGKey(0)
    k1, k2, k3, k4, k5, k6 = jax.random.split(key, 6)
    eps = 1e-5

    # Test 1: fused VMEM-resident path, f32.
    B, C, H, W = 2, 4, 16, 16
    x = jax.random.normal(k1, (B, C, H, W), dtype=jnp.float32)
    weight = 1.0 + 0.1 * jax.random.normal(k2, (C,), dtype=jnp.float32)
    bias = 0.1 * jax.random.normal(k3, (C,), dtype=jnp.float32)
    out = jax.block_until_ready(batch_norm(x, weight, bias, eps=eps))
    ref = _batch_norm_ref(x, weight, bias, eps=eps)
    assert out.shape == (B, C, H, W)
    assert jnp.allclose(out, ref, atol=1e-4, rtol=1e-4), "fused path mismatch"

    # Test 2: streaming two-pass fallback (forced tiny slab budget), with
    # HW tiling + tail masking (HW = 144 is not a multiple of 128).
    B2, C2, H2, W2 = 2, 16, 12, 12
    x2 = jax.random.normal(k4, (B2, C2, H2, W2), dtype=jnp.float32)
    weight2 = 1.0 + 0.1 * jax.random.normal(k5, (C2,), dtype=jnp.float32)
    bias2 = 0.1 * jax.random.normal(k6, (C2,), dtype=jnp.float32)
    out2 = jax.block_until_ready(
        batch_norm(x2, weight2, bias2, eps=eps, max_slab_bytes=4096))
    ref2 = _batch_norm_ref(x2, weight2, bias2, eps=eps)
    assert jnp.allclose(out2, ref2, atol=1e-4, rtol=1e-4), "fallback path mismatch"

    # Test 3: bf16 input exercising the bf16 normalize path.
    xb = x.astype(jnp.bfloat16)
    wb = weight.astype(jnp.bfloat16)
    bb = bias.astype(jnp.bfloat16)
    out3 = jax.block_until_ready(batch_norm(xb, wb, bb, eps=eps))
    ref3 = _batch_norm_ref(xb, wb, bb, eps=eps)
    assert jnp.allclose(out3.astype(jnp.float32), ref3.astype(jnp.float32),
                        atol=5e-2, rtol=5e-2), "bf16 path mismatch"

    print("KERNEL_OK")
</pallas_src>

<mosaic_0001>
module attributes {stable_mosaic.version = 11 : i64} {
  func.func @_bn_fused_kernel(%arg0: i32, %arg1: memref<2x4x256xf32, #tpu.memory_space<vmem>>, %arg2: memref<1x4x1xf32, #tpu.memory_space<vmem>>, %arg3: memref<1x4x1xf32, #tpu.memory_space<vmem>>, %arg4: memref<2x4x256xf32, #tpu.memory_space<vmem>>) attributes {dimension_semantics = [#tpu.dimension_semantics<parallel>], iteration_bounds = array<i64: 1>, scalar_prefetch = 0 : i64, scratch_operands = 0 : i64, tpu.core_type = #tpu.core_type<tc>, window_params = [{transform_indices = @transform_0, window_bounds = array<i64: 2, 4, 256>}, {transform_indices = @transform_1, window_bounds = array<i64: 1, 4, 1>}, {transform_indices = @transform_2, window_bounds = array<i64: 1, 4, 1>}, {transform_indices = @transform_3, window_bounds = array<i64: 2, 4, 256>}]} {
    %c0 = arith.constant 0 : index
    %c0_0 = arith.constant 0 : index
    %c0_1 = arith.constant 0 : index
    %0 = vector.load %arg1[%c0, %c0_0, %c0_1] : memref<2x4x256xf32, #tpu.memory_space<vmem>>, vector<2x4x256xf32>
    %cst = arith.constant dense<0.000000e+00> : vector<4xf32>
    %1 = vector.multi_reduction <add>, %0, %cst [0, 2] : vector<2x4x256xf32> to vector<4xf32>
    %2 = vector.shape_cast %1 : vector<4xf32> to vector<1x4x1xf32>
    %cst_2 = arith.constant 0.001953125 : f32
    %3 = vector.broadcast %cst_2 : f32 to vector<1x4x1xf32>
    %4 = arith.mulf %2, %3 : vector<1x4x1xf32>
    %c0_3 = arith.constant 0 : index
    %c0_4 = arith.constant 0 : index
    %c0_5 = arith.constant 0 : index
    %5 = vector.load %arg1[%c0_3, %c0_4, %c0_5] : memref<2x4x256xf32, #tpu.memory_space<vmem>>, vector<2x4x256xf32>
    %6 = vector.broadcast %4 : vector<1x4x1xf32> to vector<2x4x256xf32>
    %7 = arith.subf %5, %6 : vector<2x4x256xf32>
    %8 = arith.mulf %7, %7 : vector<2x4x256xf32>
    %cst_6 = arith.constant dense<0.000000e+00> : vector<4xf32>
    %9 = vector.multi_reduction <add>, %8, %cst_6 [0, 2] : vector<2x4x256xf32> to vector<4xf32>
    %10 = vector.shape_cast %9 : vector<4xf32> to vector<1x4x1xf32>
    %cst_7 = arith.constant 0.001953125 : f32
    %11 = vector.broadcast %cst_7 : f32 to vector<1x4x1xf32>
    %12 = arith.mulf %10, %11 : vector<1x4x1xf32>
    %cst_8 = arith.constant 9.99999974E-6 : f32
    %13 = vector.broadcast %cst_8 : f32 to vector<1x4x1xf32>
    %14 = arith.addf %12, %13 : vector<1x4x1xf32>
    %15 = math.rsqrt %14 : vector<1x4x1xf32>
    %c0_9 = arith.constant 0 : index
    %c0_10 = arith.constant 0 : index
    %c0_11 = arith.constant 0 : index
    %16 = vector.load %arg2[%c0_9, %c0_10, %c0_11] : memref<1x4x1xf32, #tpu.memory_space<vmem>>, vector<1x4x1xf32>
    %c0_12 = arith.constant 0 : index
    %c0_13 = arith.constant 0 : index
    %c0_14 = arith.constant 0 : index
    %17 = vector.load %arg3[%c0_12, %c0_13, %c0_14] : memref<1x4x1xf32, #tpu.memory_space<vmem>>, vector<1x4x1xf32>
    %18 = arith.mulf %16, %15 : vector<1x4x1xf32>
    %19 = arith.mulf %4, %18 : vector<1x4x1xf32>
    %20 = arith.subf %17, %19 : vector<1x4x1xf32>
    %c0_15 = arith.constant 0 : index
    %c0_16 = arith.constant 0 : index
    %c0_17 = arith.constant 0 : index
    %21 = vector.load %arg1[%c0_15, %c0_16, %c0_17] : memref<2x4x256xf32, #tpu.memory_space<vmem>>, vector<2x4x256xf32>
    %22 = vector.broadcast %18 : vector<1x4x1xf32> to vector<2x4x256xf32>
    %23 = arith.mulf %21, %22 : vector<2x4x256xf32>
    %24 = vector.broadcast %20 : vector<1x4x1xf32> to vector<2x4x256xf32>
    %25 = arith.addf %23, %24 : vector<2x4x256xf32>
    %c0_18 = arith.constant 0 : index
    %c0_19 = arith.constant 0 : index
    %c0_20 = arith.constant 0 : index
    %26 = vector.load %arg4[%c0_18, %c0_19, %c0_20] : memref<2x4x256xf32, #tpu.memory_space<vmem>>, vector<2x4x256xf32>
    tpu.vector_store %arg4[%c0_18, %c0_19, %c0_20], %25 {strides = array<i32>} : memref<2x4x256xf32, #tpu.memory_space<vmem>>, vector<2x4x256xf32>,
    return
  }
  func.func @transform_0(%arg0: i32) -> (i32, i32, i32) {
    %c0_i32 = arith.constant 0 : i32
    %c0_i32_0 = arith.constant 0 : i32
    %c0_i32_1 = arith.constant 0 : i32
    return %c0_i32, %arg0, %c0_i32_0 : i32, i32, i32
  }
  func.func @transform_1(%arg0: i32) -> (i32, i32, i32) {
    %c0_i32 = arith.constant 0 : i32
    %c0_i32_0 = arith.constant 0 : i32
    %c0_i32_1 = arith.constant 0 : i32
    return %c0_i32, %arg0, %c0_i32_0 : i32, i32, i32
  }
  func.func @transform_2(%arg0: i32) -> (i32, i32, i32) {
    %c0_i32 = arith.constant 0 : i32
    %c0_i32_0 = arith.constant 0 : i32
    %c0_i32_1 = arith.constant 0 : i32
    return %c0_i32, %arg0, %c0_i32_0 : i32, i32, i32
  }
  func.func @transform_3(%arg0: i32) -> (i32, i32, i32) {
    %c0_i32 = arith.constant 0 : i32
    %c0_i32_0 = arith.constant 0 : i32
    %c0_i32_1 = arith.constant 0 : i32
    return %c0_i32, %arg0, %c0_i32_0 : i32, i32, i32
  }
}

</mosaic_0001>

<llo_original>
// kernel: tpu_custom_call.1
$region0: #{tpu_custom_call.1}
  #allocation0 [shape = 'u32[]', space=smem, size = 0x4, offset = 0x4, fixed_abs, tag = 'smem constant byte address 0x4 - core index']
  #allocation1 [shape = 'u32[144,128]{1,0:T(1,128)}', space=vmem, size = 0x12000, scoped, tag = 'internal scratch']
  %s0 = inlined_call_operand.hbm [shape: f32[2,4,256], index: 0, kind: input, shape index: {}]
  %s1 = inlined_call_operand.vmem [shape: f32[1,4,1], index: 1, kind: input, shape index: {}]
  %s2 = inlined_call_operand.vmem [shape: f32[1,4,1], index: 2, kind: input, shape index: {}]
  %s3 = inlined_call_operand.hbm [shape: f32[2,4,256], index: 3, kind: output, shape index: {}]
  %s4 = sld [smem:[#allocation0]]
  $region26: #{tpu_custom_call.1} parent=0
    _
  %s6 = ssub.s32 1, %s4
  %s7 = scalar_select 0, %s6, %s4
  $region1: #{tpu_custom_call.1} parent=0
    #allocation2 [shape = 'u8[8192]{0}', space=vmem, size = 0x2000, scoped, tag = 'input window, operand 0, single buffered']
    #allocation3 [shape = 's32[1]{0}', space=sflag, size = 0x4, scoped, tag = 'scoped memory for tpu_custom_call.1']
    #allocation4 [shape = 's32[1]{0}', space=sflag, size = 0x4, scoped, tag = 'scoped memory for tpu_custom_call.1']
    #allocation5 [shape = 'u8[8192]{0}', space=vmem, size = 0x2000, scoped, tag = 'output window, operand 0, single buffered']
    %8 = vsyncpa [#allocation3], 0
    %9 = vsyncpa [#allocation4], 0
    // Predicated region
    $region2: #{tpu_custom_call.1} parent=1 // pred_check
      _
    $region3: #{tpu_custom_call.1} parent=1 // pred_check_branch
      %11 = sbr.rel (0) target = $region5
    $region4: #{tpu_custom_call.1} parent=1 // pred_region
      %s13 = ssub.s32 256, 256
      %14 = vsyncadd [#allocation3], %s13
      %s15 = sshll.u32 [#allocation2], 4
      %s16 = int_to_ptr.vmem [resolvable:$true] %s15
      %21 = dma.hbm_to_vmem [thread:$0]  %s0, 256, %s16, [#allocation3], 128, 128, 8
    $region5: #{tpu_custom_call.1} parent=1 // pred_fallthru
      _
    // Predicated region
    $region6: #{tpu_custom_call.1} parent=1 // pred_check
      _
    $region7: #{tpu_custom_call.1} parent=1 // pred_check_branch
      %23 = sbr.rel (0) target = $region9
    $region8: #{tpu_custom_call.1} parent=1 // pred_region
      _
    $region9: #{tpu_custom_call.1} parent=1 // pred_fallthru
      _
    // Predicated region
    $region10: #{tpu_custom_call.1} parent=1 // pred_check
      _
    $region11: #{tpu_custom_call.1} parent=1 // pred_check_branch
      %25 = sbr.rel (0) target = $region13
    $region12: #{tpu_custom_call.1} parent=1 // pred_region
      _
    $region13: #{tpu_custom_call.1} parent=1 // pred_fallthru
      _
    // Predicated region
    $region14: #{tpu_custom_call.1} parent=1 // pred_check
      _
    $region15: #{tpu_custom_call.1} parent=1 // pred_check_branch
      %27 = sbr.rel (0) target = $region17
    $region16: #{tpu_custom_call.1} parent=1 // pred_region
      %28 = dma.done [#allocation3], 256
    $region17: #{tpu_custom_call.1} parent=1 // pred_fallthru
      _
    %v29 = vld [vmem:[#allocation2] sm:$0xff]
    %v30 = vld [vmem:[#allocation2 + $0x8] sm:$0xff]
    %v33 = vcombine.high %v29, %v29
    %v34 = vcombine.high %v30, %v30
    %vm37 = vcmask 1043456
    %v38 = vsel %vm37, %v29, 0.0
    %v39 = vsel %vm37, %v33, 0.0
    %v40 = vadd.f32 %v38, %v39
    %v41 = vsel %vm37, %v30, 0.0
    %v42 = vadd.f32 %v40, %v41
    %v43 = vsel %vm37, %v34, 0.0
    %v44 = vadd.f32 %v42, %v43
    %45 = vadd.xlane.f32.xlu0 %v44
    %v46 = vpop.xlane.xlu0 %45
    %v47 = vmul.f32 %v46, 0.001953125
    %v50 = vunpack.c.l.s4 839922192
    %v51 = vunpack.c.0.s8 %v50
    %v52 = vlaneseq
    %v53 = vshrl.u32 %v52, 7
    %v54 = vsub.s32 %v51, %v53
    %v55 = vrot.slane %v47, %v54
    %v57 = vsub.f32 %v29, %v55
    %v58 = vsub.f32 %v30, %v55
    %v59 = vmul.f32 %v57, %v57
    %v60 = vmul.f32 %v58, %v58
    %v63 = vcombine.high %v59, %v59
    %v64 = vcombine.high %v60, %v60
    %v67 = vsel %vm37, %v59, 0.0
    %v68 = vsel %vm37, %v63, 0.0
    %v69 = vadd.f32 %v67, %v68
    %v70 = vsel %vm37, %v60, 0.0
    %v71 = vadd.f32 %v69, %v70
    %v72 = vsel %vm37, %v64, 0.0
    %v73 = vadd.f32 %v71, %v72
    %74 = vadd.xlane.f32.xlu0 %v73
    %v75 = vpop.xlane.xlu0 %74
    %v76 = vmul.f32 %v75, 0.001953125
    %v77 = vadd.f32 %v76, 1e-05
    %v78 = vrsqrt.pop %v77
    %v79 = vld [vmem:[%s1] sm:$0xf]
    %v80 = vld [vmem:[%s2] sm:$0xf]
    %v81 = vmul.f32 %v79, %v78
    %v82 = vmul.f32 %v47, %v81
    %v83 = vsub.f32 %v80, %v82
    %85 = vset.pattern.permute.xlu0 0
    %86 = vperm.xlu0 %85, %v81
    %v87 = vpop.permute.xlu0 %86
    %v89 = vunpack.c.l.s4 839922192
    %v90 = vunpack.c.0.s8 %v89
    %v91 = vlaneseq
    %v92 = vshrl.u32 %v91, 7
    %v93 = vsub.s32 %v90, %v92
    %v94 = vrot.slane %v87, %v93
    %v96 = vmul.f32 %v29, %v94
    %v97 = vmul.f32 %v30, %v94
    %99 = vset.pattern.permute.xlu0 0
    %100 = vperm.xlu0 %99, %v83
    %v101 = vpop.permute.xlu0 %100
    %v103 = vunpack.c.l.s4 839922192
    %v104 = vunpack.c.0.s8 %v103
    %v105 = vlaneseq
    %v106 = vshrl.u32 %v105, 7
    %v107 = vsub.s32 %v104, %v106
    %v108 = vrot.slane %v101, %v107
    %v110 = vadd.f32 %v96, %v108
    %v111 = vadd.f32 %v97, %v108
    %112 = vst [vmem:[#allocation5] sm:$0xff] %v110
    %113 = vst [vmem:[#allocation5 + $0x8] sm:$0xff] %v111
    // Predicated region
    $region18: #{tpu_custom_call.1} parent=1 // pred_check
      _
    $region19: #{tpu_custom_call.1} parent=1 // pred_check_branch
      %115 = sbr.rel (0) target = $region21
    $region20: #{tpu_custom_call.1} parent=1 // pred_region
      %s117 = ssub.s32 256, 256
      %118 = vsyncadd [#allocation4], %s117
      %s119 = sshll.u32 [#allocation5], 4
      %s120 = int_to_ptr.vmem [resolvable:$true] %s119
      %125 = dma.vmem_to_hbm [thread:$0]  %s120, 256, %s3, [#allocation4], 128, 128, 8
    $region21: #{tpu_custom_call.1} parent=1 // pred_fallthru
      _
    // Predicated region
    $region22: #{tpu_custom_call.1} parent=1 // pred_check
      _
    $region23: #{tpu_custom_call.1} parent=1 // pred_check_branch
      %127 = sbr.rel (0) target = $region25
    $region24: #{tpu_custom_call.1} parent=1 // pred_region
      %128 = dma.done [#allocation4], 256
    $region25: #{tpu_custom_call.1} parent=1 // pred_fallthru
      _
    %129 = vsyncpa [#allocation3], 1
    %130 = vsyncpa [#allocation4], 1

</llo_original>
